<compile_context>
chip_gen: v7x
topology: tpu7x:2x2x1
jax: 0.10.0
libtpu: 0.0.40
codegen_flags: <defaults>
</compile_context>

<pallas_src>
import functools

import jax
import jax.numpy as jnp
from jax.experimental import pallas as pl
from jax.experimental.pallas import tpu as pltpu

NEG_SLOPE = 0.01  # F.leaky_relu default negative_slope


def _leaky(x):
    # max(x, a*x) == leaky_relu(x) for 0 < a < 1
    return jnp.maximum(x, NEG_SLOPE * x)


def _pick_tile(n, prefs):
    for t in prefs:
        if t <= n and n % t == 0:
            return t
    return n


# ----------------------------------------------------------------------------
# Encoder pass 1: H = leaky_relu((A @ X) @ W1 + b1), tiled over (rows, K=N).
# ----------------------------------------------------------------------------
def gcn1_kernel(a_ref, x_ref, w1_ref, b1_ref, h_ref, acc_ref, *, bf16_matmul=False):
    k = pl.program_id(1)

    @pl.when(k == 0)
    def _():
        acc_ref[...] = jnp.zeros_like(acc_ref)

    a = a_ref[...]
    x = x_ref[...]
    if bf16_matmul:
        a = a.astype(jnp.bfloat16)
        x = x.astype(jnp.bfloat16)
    acc_ref[...] += jnp.dot(a, x, preferred_element_type=jnp.float32)

    @pl.when(k == pl.num_programs(1) - 1)
    def _():
        h = jnp.dot(acc_ref[...], w1_ref[...],
                    preferred_element_type=jnp.float32) + b1_ref[...]
        h_ref[...] = _leaky(h)


# ----------------------------------------------------------------------------
# Encoder pass 2: mu/logvar heads (fused), reparameterize, fc1 pre-projection,
# plus the tiny u/v matvecs that carry the linear part of the decoder leaky.
# ----------------------------------------------------------------------------
def gcn2_kernel(a_ref, h_ref, eps_ref, wmulv_ref, bmulv_ref, wab_ref, bfc1_ref,
                w2_ref, mu_ref, lv_ref, hi_ref, hjt_ref, u_ref, v_ref, acc_ref,
                *, bf16_matmul=False):
    k = pl.program_id(1)

    @pl.when(k == 0)
    def _():
        acc_ref[...] = jnp.zeros_like(acc_ref)

    a = a_ref[...]
    h = h_ref[...]
    if bf16_matmul:
        a = a.astype(jnp.bfloat16)
        h = h.astype(jnp.bfloat16)
    acc_ref[...] += jnp.dot(a, h, preferred_element_type=jnp.float32)

    @pl.when(k == pl.num_programs(1) - 1)
    def _():
        ah = acc_ref[...]                                   # (tm_e, hidden)
        mulv = jnp.dot(ah, wmulv_ref[...],
                       preferred_element_type=jnp.float32) + bmulv_ref[...]
        L = mulv.shape[1] // 2
        mu = mulv[:, :L]
        lv = mulv[:, L:]
        mu_ref[...] = mu
        lv_ref[...] = lv

        # Reparameterize: Z = mu + eps * exp(0.5 * logvar)
        z = mu + eps_ref[...] * jnp.exp(0.5 * lv)           # (tm_e, L)

        # fc1([Z[i]; Z[j]]) = Z[i]@W1a + Z[j]@W1b + bfc1 -> precompute both halves.
        zw = jnp.dot(z, wab_ref[...], preferred_element_type=jnp.float32)
        L2 = 2 * L
        hi = zw[:, :L2] + bfc1_ref[...]                     # bias folded once
        hj = zw[:, L2:]
        hi_ref[...] = hi
        hjt = jnp.transpose(hj)                             # (L2, tm_e)
        hjt_ref[...] = hjt

        # Linear-term vectors for the decoder's leaky split:
        #   u_i = w2 . Hi[i,:]   v_j = w2 . HjT[:,j]
        w2 = w2_ref[...]                                    # (1, L2)
        u_ref[...] = jnp.sum(hi * w2, axis=1, keepdims=True)            # (tm_e, 1)
        v_ref[...] = jnp.dot(w2, hjt, preferred_element_type=jnp.float32)  # (1, tm_e)


# ----------------------------------------------------------------------------
# Decoder: one (tm, tn) tile of A_pred per grid step; no (N,N,2L) tensor.
# Row-chunked accumulation keeps acc vreg-resident; leaky split saves one
# multiply per k in the VALU-bound inner loop.
# ----------------------------------------------------------------------------
def vgae_decoder_kernel(hi_ref, hjt_ref, u_ref, v_ref, w2s_ref, b2_ref, apred_ref):
    tm, L2 = hi_ref.shape
    tn = hjt_ref.shape[1]
    chunk = 8 if tm % 8 == 0 else tm
    n_chunks = tm // chunk

    hjt = hjt_ref[...]                                  # (L2, tn): resident across chunks
    v_lin = NEG_SLOPE * v_ref[...] + b2_ref[0]          # (1, tn): hoisted

    @pl.loop(0, n_chunks)
    def _(c):
        r0 = pl.multiple_of(c * chunk, chunk)
        hi_c = hi_ref[pl.ds(r0, chunk), :]              # (chunk, L2)
        # linear part of leaky: a*(u_i + v_j) + b2, added once per output element
        acc = NEG_SLOPE * u_ref[pl.ds(r0, chunk), :] + v_lin   # (chunk, tn)
        # unrolled k-loop: add + relu + scale + acc (4 VALU ops/k, lane-dense)
        for k in range(L2):
            t = hi_c[:, k:k + 1] + hjt[k:k + 1, :]      # (chunk, tn)
            acc = acc + w2s_ref[k] * jnp.maximum(t, 0.0)
        apred_ref[pl.ds(r0, chunk), :] = jax.nn.sigmoid(acc)


# ----------------------------------------------------------------------------
# Wrapper
# ----------------------------------------------------------------------------
def vgae_forward(A_hat, X, eps, params, *, tm=None, tn=None, tm_e=None, tk_e=None,
                 bf16_matmul=False):
    N = A_hat.shape[0]
    in_dim = X.shape[1]
    hidden = params["w1"].shape[1]
    L = params["wmu"].shape[1]
    L2 = 2 * L
    f32 = jnp.float32

    # Fuse mu/logvar heads and the two fc1 halves (layout plumbing only).
    wmulv = jnp.concatenate([params["wmu"], params["wlv"]], axis=1)   # (hidden, 2L)
    bmulv = jnp.concatenate([params["bmu"], params["blv"]], axis=1)   # (1, 2L)
    wab = jnp.concatenate([params["w1a"], params["w1b"]], axis=1)     # (L, 4L)
    w2row = params["w2"].reshape(1, L2).astype(f32)                   # (1, 2L)

    # -------- encoder tiles --------
    tm_e = tm_e or _pick_tile(N, (256, 128, 64, 32, 16, 8))
    tk_e = tk_e or _pick_tile(N, (512, 256, 128, 64, 32, 16, 8))
    grid_e = (N // tm_e, N // tk_e)
    enc_cp = pltpu.CompilerParams(dimension_semantics=("parallel", "arbitrary"))

    def full(shape):
        return pl.BlockSpec(shape, lambda i, k: (0, 0))

    # ---------------- pass 1: H ----------------
    H = pl.pallas_call(
        functools.partial(gcn1_kernel, bf16_matmul=bf16_matmul),
        out_shape=jax.ShapeDtypeStruct((N, hidden), f32),
        grid=grid_e,
        in_specs=[
            pl.BlockSpec((tm_e, tk_e), lambda i, k: (i, k)),    # A row/col tile
            pl.BlockSpec((tk_e, in_dim), lambda i, k: (k, 0)),  # X K-tile
            full((in_dim, hidden)),                             # W1
            full((1, hidden)),                                  # b1
        ],
        out_specs=pl.BlockSpec((tm_e, hidden), lambda i, k: (i, 0)),
        scratch_shapes=[pltpu.VMEM((tm_e, in_dim), f32)],
        compiler_params=enc_cp,
        cost_estimate=pl.CostEstimate(
            flops=2 * N * N * in_dim + 2 * N * in_dim * hidden,
            transcendentals=0,
            bytes_accessed=4 * (N * N + N * in_dim + N * hidden)),
    )(A_hat, X, params["w1"], params["b1"])

    # ---------------- pass 2: heads + reparam + fc1 preproj ----------------
    mu, logvar, Hi, HjT, u, v = pl.pallas_call(
        functools.partial(gcn2_kernel, bf16_matmul=bf16_matmul),
        out_shape=(jax.ShapeDtypeStruct((N, L), f32),    # mu
                   jax.ShapeDtypeStruct((N, L), f32),    # logvar
                   jax.ShapeDtypeStruct((N, L2), f32),   # Hi  = Z@W1a + bfc1
                   jax.ShapeDtypeStruct((L2, N), f32),   # HjT = (Z@W1b)^T
                   jax.ShapeDtypeStruct((N, 1), f32),    # u   = Hi . w2
                   jax.ShapeDtypeStruct((1, N), f32)),   # v   = w2 . HjT
        grid=grid_e,
        in_specs=[
            pl.BlockSpec((tm_e, tk_e), lambda i, k: (i, k)),    # A
            pl.BlockSpec((tk_e, hidden), lambda i, k: (k, 0)),  # H K-tile
            pl.BlockSpec((tm_e, L), lambda i, k: (i, 0)),       # eps
            full((hidden, L2)),                                 # Wmu|Wlv
            full((1, L2)),                                      # bmu|blv
            full((L, 2 * L2)),                                  # W1a|W1b
            full((1, L2)),                                      # bfc1
            full((1, L2)),                                      # w2 row
        ],
        out_specs=(pl.BlockSpec((tm_e, L), lambda i, k: (i, 0)),
                   pl.BlockSpec((tm_e, L), lambda i, k: (i, 0)),
                   pl.BlockSpec((tm_e, L2), lambda i, k: (i, 0)),
                   pl.BlockSpec((L2, tm_e), lambda i, k: (0, i)),
                   pl.BlockSpec((tm_e, 1), lambda i, k: (i, 0)),
                   pl.BlockSpec((1, tm_e), lambda i, k: (0, i))),
        scratch_shapes=[pltpu.VMEM((tm_e, hidden), f32)],
        compiler_params=enc_cp,
        cost_estimate=pl.CostEstimate(
            flops=2 * N * N * hidden + 2 * N * hidden * L2 + 6 * N * L * L2,
            transcendentals=N * L,
            bytes_accessed=4 * (N * N + N * hidden + 5 * N * L2)),
    )(A_hat, H, eps, wmulv, bmulv, wab, params["bfc1"], w2row)

    # ---------------- tiled decoder ----------------
    tm = tm or _pick_tile(N, (256, 128, 64, 32, 16, 8))
    tn = tn or _pick_tile(N, (1024, 512, 256, 128))
    grid_d = (N // tm, N // tn)

    w2s = ((1.0 - NEG_SLOPE) * params["w2"]).reshape(L2).astype(f32)  # SMEM scalars
    b2 = params["b2"].reshape(1).astype(f32)
    smem = pl.BlockSpec(memory_space=pltpu.MemorySpace.SMEM)

    # Right-size the VMEM request (double-buffered tiles + headroom), not 64 MiB.
    dec_need = 4 * 2 * (tm * tn + tm * L2 + L2 * tn + tm + tn)
    dec_vmem = min(48 * 1024 * 1024, max(8 * 1024 * 1024, dec_need + 2 * 1024 * 1024))

    A_pred = pl.pallas_call(
        vgae_decoder_kernel,
        out_shape=jax.ShapeDtypeStruct((N, N), f32),
        grid=grid_d,
        in_specs=[
            pl.BlockSpec((tm, L2), lambda i, j: (i, 0)),   # Hi row tile
            pl.BlockSpec((L2, tn), lambda i, j: (0, j)),   # HjT col tile
            pl.BlockSpec((tm, 1), lambda i, j: (i, 0)),    # u row vec
            pl.BlockSpec((1, tn), lambda i, j: (0, j)),    # v col vec
            smem,                                          # (1-a)*w2 scalars
            smem,                                          # b2 scalar
        ],
        out_specs=pl.BlockSpec((tm, tn), lambda i, j: (i, j)),
        compiler_params=pltpu.CompilerParams(
            dimension_semantics=("parallel", "parallel"),
            vmem_limit_bytes=dec_vmem),
        cost_estimate=pl.CostEstimate(
            flops=4 * N * N * L2 + 4 * N * N,
            transcendentals=N * N,
            bytes_accessed=4 * (N * N + 2 * N * L2 + 2 * N)),
    )(Hi, HjT, u, v, w2s, b2)

    return A_pred, mu, logvar


# ----------------------------------------------------------------------------
# Pure-JAX reference mirroring the PyTorch forward, for verification.
# ----------------------------------------------------------------------------
def vgae_reference(A_hat, X, eps, params):
    pre1 = A_hat @ X @ params["w1"] + params["b1"]
    H = jnp.where(pre1 > 0, pre1, NEG_SLOPE * pre1)
    AH = A_hat @ H
    mu = AH @ params["wmu"] + params["bmu"]
    logvar = AH @ params["wlv"] + params["blv"]
    Z = mu + eps * jnp.exp(0.5 * logvar)
    Hi = Z @ params["w1a"]
    Hj = Z @ params["w1b"]
    pre = Hi[:, None, :] + Hj[None, :, :] + params["bfc1"][None, :, :]
    h = jnp.where(pre > 0, pre, NEG_SLOPE * pre)
    logits = jnp.sum(h * params["w2"][None, :, :], axis=-1) + params["b2"]
    return jax.nn.sigmoid(logits), mu, logvar


if __name__ == "__main__":
    N, in_dim, hidden_dim, latent_dim = 8, 16, 32, 8
    L2 = 2 * latent_dim

    key = jax.random.PRNGKey(0)
    ks = jax.random.split(key, 16)

    # Inputs
    A = jax.random.uniform(ks[0], (N, N), dtype=jnp.float32)
    A_hat = (A + A.T) * 0.5
    X = jax.random.normal(ks[1], (N, in_dim), dtype=jnp.float32)
    # TODO(synk): eps is an explicit input (torch.randn_like replaced) so the
    # kernel stays deterministic and verifiable against the reference.
    eps = jax.random.normal(ks[2], (N, latent_dim), dtype=jnp.float32)

    # Deterministic synthetic parameters (weights pre-transposed to (in, out))
    s = 0.1
    params = {
        "w1":  jax.random.normal(ks[3], (in_dim, hidden_dim), dtype=jnp.float32) * s,
        "b1":  jax.random.normal(ks[4], (1, hidden_dim), dtype=jnp.float32) * s,
        "wmu": jax.random.normal(ks[5], (hidden_dim, latent_dim), dtype=jnp.float32) * s,
        "bmu": jax.random.normal(ks[6], (1, latent_dim), dtype=jnp.float32) * s,
        "wlv": jax.random.normal(ks[7], (hidden_dim, latent_dim), dtype=jnp.float32) * s,
        "blv": jax.random.normal(ks[8], (1, latent_dim), dtype=jnp.float32) * s,
    }
    wfc1_t = jax.random.normal(ks[9], (L2, L2), dtype=jnp.float32) * s  # fc1.weight.T
    params["w1a"] = wfc1_t[:latent_dim, :]       # multiplies Z[i]
    params["w1b"] = wfc1_t[latent_dim:, :]       # multiplies Z[j]
    params["bfc1"] = jax.random.normal(ks[10], (1, L2), dtype=jnp.float32) * s
    params["w2"] = jax.random.normal(ks[11], (1, L2), dtype=jnp.float32) * s  # fc2.weight
    params["b2"] = jax.random.normal(ks[12], (1, 1), dtype=jnp.float32) * s   # fc2.bias

    A_pred, mu, logvar = vgae_forward(A_hat, X, eps, params)
    jax.block_until_ready((A_pred, mu, logvar))

    # Verify against pure-JAX reference (f32 path; bf16_matmul=False by default)
    A_ref, mu_ref, lv_ref = vgae_reference(A_hat, X, eps, params)
    assert jnp.allclose(A_pred, A_ref, atol=1e-5, rtol=1e-5)
    assert jnp.allclose(mu, mu_ref, atol=1e-5, rtol=1e-5)
    assert jnp.allclose(logvar, lv_ref, atol=1e-5, rtol=1e-5)
    assert A_pred.shape == (N, N) and mu.shape == (N, latent_dim)

    print("KERNEL_OK")
</pallas_src>

<mosaic_0001>
module attributes {stable_mosaic.version = 11 : i64} {
  func.func @gcn1_kernel(%arg0: i32, %arg1: i32, %arg2: memref<8x8xf32, #tpu.memory_space<vmem>>, %arg3: memref<8x16xf32, #tpu.memory_space<vmem>>, %arg4: memref<16x32xf32, #tpu.memory_space<vmem>>, %arg5: memref<1x32xf32, #tpu.memory_space<vmem>>, %arg6: memref<8x32xf32, #tpu.memory_space<vmem>>, %arg7: memref<8x16xf32, #tpu.memory_space<vmem>>) attributes {dimension_semantics = [#tpu.dimension_semantics<parallel>, #tpu.dimension_semantics<arbitrary>], iteration_bounds = array<i64: 1, 1>, scalar_prefetch = 0 : i64, scratch_operands = 1 : i64, tpu.core_type = #tpu.core_type<tc>, window_params = [{transform_indices = @transform_0, window_bounds = array<i64: 8, 8>}, {transform_indices = @transform_1, window_bounds = array<i64: 8, 16>}, {pipeline_mode = #tpu.pipeline_mode<synchronous>, transform_indices = @transform_2, window_bounds = array<i64: 16, 32>}, {pipeline_mode = #tpu.pipeline_mode<synchronous>, transform_indices = @transform_3, window_bounds = array<i64: 1, 32>}, {transform_indices = @transform_4, window_bounds = array<i64: 8, 32>}]} {
    %c0_i32 = arith.constant 0 : i32
    %0 = arith.cmpi eq, %arg1, %c0_i32 : i32
    %1 = arith.extui %0 : i1 to i32
    %c0_i32_0 = arith.constant 0 : i32
    %2 = arith.cmpi ne, %1, %c0_i32_0 : i32
    scf.if %2 {
      %cst_10 = arith.constant 0.000000e+00 : f32
      %12 = vector.broadcast %cst_10 : f32 to vector<8x16xf32>
      %c0_11 = arith.constant 0 : index
      %c0_12 = arith.constant 0 : index
      %13 = vector.load %arg7[%c0_11, %c0_12] : memref<8x16xf32, #tpu.memory_space<vmem>>, vector<8x16xf32>
      tpu.vector_store %arg7[%c0_11, %c0_12], %12 {strides = array<i32>} : memref<8x16xf32, #tpu.memory_space<vmem>>, vector<8x16xf32>,
    } else {
    }
    %c0 = arith.constant 0 : index
    %c0_1 = arith.constant 0 : index
    %3 = vector.load %arg2[%c0, %c0_1] : memref<8x8xf32, #tpu.memory_space<vmem>>, vector<8x8xf32>
    %c0_2 = arith.constant 0 : index
    %c0_3 = arith.constant 0 : index
    %4 = vector.load %arg3[%c0_2, %c0_3] : memref<8x16xf32, #tpu.memory_space<vmem>>, vector<8x16xf32>
    %c0_4 = arith.constant 0 : index
    %c0_5 = arith.constant 0 : index
    %5 = vector.load %arg7[%c0_4, %c0_5] : memref<8x16xf32, #tpu.memory_space<vmem>>, vector<8x16xf32>
    %cst = arith.constant dense<0.000000e+00> : vector<8x16xf32>
    %6 = tpu.matmul %3, %4, %cst {dimension_numbers = #tpu.dot_dimension_numbers<[1], [0], [0], [1], [0, 0, 1, 1], [], []>} : vector<8x8xf32>, vector<8x16xf32>, vector<8x16xf32> -> vector<8x16xf32>
    %7 = arith.addf %5, %6 : vector<8x16xf32>
    %c0_6 = arith.constant 0 : index
    %c0_7 = arith.constant 0 : index
    %8 = vector.load %arg7[%c0_6, %c0_7] : memref<8x16xf32, #tpu.memory_space<vmem>>, vector<8x16xf32>
    tpu.vector_store %arg7[%c0_6, %c0_7], %7 {strides = array<i32>} : memref<8x16xf32, #tpu.memory_space<vmem>>, vector<8x16xf32>,
    %c0_i32_8 = arith.constant 0 : i32
    %9 = arith.cmpi eq, %arg1, %c0_i32_8 : i32
    %10 = arith.extui %9 : i1 to i32
    %c0_i32_9 = arith.constant 0 : i32
    %11 = arith.cmpi ne, %10, %c0_i32_9 : i32
    scf.if %11 {
      %c0_10 = arith.constant 0 : index
      %c0_11 = arith.constant 0 : index
      %12 = vector.load %arg7[%c0_10, %c0_11] : memref<8x16xf32, #tpu.memory_space<vmem>>, vector<8x16xf32>
      %c0_12 = arith.constant 0 : index
      %c0_13 = arith.constant 0 : index
      %13 = vector.load %arg4[%c0_12, %c0_13] : memref<16x32xf32, #tpu.memory_space<vmem>>, vector<16x32xf32>
      %cst_14 = arith.constant dense<0.000000e+00> : vector<8x32xf32>
      %14 = tpu.matmul %12, %13, %cst_14 {dimension_numbers = #tpu.dot_dimension_numbers<[1], [0], [0], [1], [0, 0, 1, 1], [], []>} : vector<8x16xf32>, vector<16x32xf32>, vector<8x32xf32> -> vector<8x32xf32>
      %c0_15 = arith.constant 0 : index
      %c0_16 = arith.constant 0 : index
      %15 = vector.load %arg5[%c0_15, %c0_16] : memref<1x32xf32, #tpu.memory_space<vmem>>, vector<1x32xf32>
      %16 = vector.broadcast %15 : vector<1x32xf32> to vector<8x32xf32>
      %17 = arith.addf %14, %16 : vector<8x32xf32>
      %cst_17 = arith.constant 0.00999999977 : f32
      %18 = vector.broadcast %cst_17 : f32 to vector<8x32xf32>
      %19 = arith.mulf %18, %17 : vector<8x32xf32>
      %20 = arith.maximumf %17, %19 : vector<8x32xf32>
      %c0_18 = arith.constant 0 : index
      %c0_19 = arith.constant 0 : index
      %21 = vector.load %arg6[%c0_18, %c0_19] : memref<8x32xf32, #tpu.memory_space<vmem>>, vector<8x32xf32>
      tpu.vector_store %arg6[%c0_18, %c0_19], %20 {strides = array<i32>} : memref<8x32xf32, #tpu.memory_space<vmem>>, vector<8x32xf32>,
    } else {
    }
    return
  }
  func.func @transform_0(%arg0: i32, %arg1: i32) -> (i32, i32) {
    %c0_i32 = arith.constant 0 : i32
    return %arg0, %arg1 : i32, i32
  }
  func.func @transform_1(%arg0: i32, %arg1: i32) -> (i32, i32) {
    %c0_i32 = arith.constant 0 : i32
    %c0_i32_0 = arith.constant 0 : i32
    return %arg1, %c0_i32 : i32, i32
  }
  func.func @transform_2(%arg0: i32, %arg1: i32) -> (i32, i32) {
    %c0_i32 = arith.constant 0 : i32
    %c0_i32_0 = arith.constant 0 : i32
    %c0_i32_1 = arith.constant 0 : i32
    return %c0_i32, %c0_i32_0 : i32, i32
  }
  func.func @transform_3(%arg0: i32, %arg1: i32) -> (i32, i32) {
    %c0_i32 = arith.constant 0 : i32
    %c0_i32_0 = arith.constant 0 : i32
    %c0_i32_1 = arith.constant 0 : i32
    return %c0_i32, %c0_i32_0 : i32, i32
  }
  func.func @transform_4(%arg0: i32, %arg1: i32) -> (i32, i32) {
    %c0_i32 = arith.constant 0 : i32
    %c0_i32_0 = arith.constant 0 : i32
    return %arg0, %c0_i32 : i32, i32
  }
}

</mosaic_0001>

<llo_original>
// kernel: tpu_custom_call.1
$region0: #{tpu_custom_call.1}
  #allocation0 [shape = 'u32[]', space=smem, size = 0x4, offset = 0x4, fixed_abs, tag = 'smem constant byte address 0x4 - core index']
  #allocation1 [shape = 'u32[144,128]{1,0:T(1,128)}', space=vmem, size = 0x12000, scoped, tag = 'internal scratch']
  #allocation2 [shape = 'f32[8,16]{1,0:T(8,128)}', space=vmem, size = 0x1000, scoped, tag = 'scratch operand']
  %s0 = inlined_call_operand.hbm [shape: f32[8,8], index: 0, kind: input, shape index: {}]
  %s1 = inlined_call_operand.hbm [shape: f32[8,16], index: 1, kind: input, shape index: {}]
  %s2 = inlined_call_operand.hbm [shape: f32[16,32], index: 2, kind: input, shape index: {}]
  %s3 = inlined_call_operand.vmem [shape: f32[1,32], index: 3, kind: input, shape index: {}]
  %s4 = inlined_call_operand.hbm [shape: f32[8,32], index: 4, kind: output, shape index: {}]
  %s5 = sld [smem:[#allocation0]]
  $region46: #{tpu_custom_call.1} parent=0
    _
  %s7 = ssub.s32 1, %s5
  %s8 = scalar_select 0, %s7, %s5
  $region1: #{tpu_custom_call.1} parent=0
    #allocation3 [shape = 'u8[4096]{0}', space=vmem, size = 0x1000, scoped, tag = 'input window, operand 0, single buffered']
    #allocation4 [shape = 's32[1]{0}', space=sflag, size = 0x4, scoped, tag = 'scoped memory for tpu_custom_call.1']
    #allocation5 [shape = 's32[1]{0}', space=sflag, size = 0x4, scoped, tag = 'scoped memory for tpu_custom_call.1']
    #allocation6 [shape = 'u8[4096]{0}', space=vmem, size = 0x1000, scoped, tag = 'input window, operand 1, single buffered']
    #allocation7 [shape = 's32[1]{0}', space=sflag, size = 0x4, scoped, tag = 'scoped memory for tpu_custom_call.1']
    #allocation8 [shape = 'u8[8192]{0}', space=vmem, size = 0x2000, scoped, tag = 'input window, operand 2, single buffered']
    #allocation9 [shape = 'u8[4096]{0}', space=vmem, size = 0x1000, scoped, tag = 'output window, operand 0, single buffered']
    %9 = vsyncpa [#allocation4], 0
    %10 = vsyncpa [#allocation7], 0
    %11 = vsyncpa [#allocation5], 0
    // Predicated region
    $region2: #{tpu_custom_call.1} parent=1 // pred_check
      _
    $region3: #{tpu_custom_call.1} parent=1 // pred_check_branch
      %13 = sbr.rel (0) target = $region5
    $region4: #{tpu_custom_call.1} parent=1 // pred_region
      %s15 = ssub.s32 128, 128
      %16 = vsyncadd [#allocation4], %s15
      %s18 = sshll.u32 [#allocation3], 4
      %s19 = int_to_ptr.vmem [resolvable:$true] %s18
      %21 = dma.hbm_to_vmem [thread:$0]  %s0, 128, %s19, [#allocation4]
    $region5: #{tpu_custom_call.1} parent=1 // pred_fallthru
      _
    // Predicated region
    $region6: #{tpu_custom_call.1} parent=1 // pred_check
      _
    $region7: #{tpu_custom_call.1} parent=1 // pred_check_branch
      %23 = sbr.rel (0) target = $region9
    $region8: #{tpu_custom_call.1} parent=1 // pred_region
      %s25 = ssub.s32 128, 128
      %26 = vsyncadd [#allocation7], %s25
      %s28 = sshll.u32 [#allocation6], 4
      %s29 = int_to_ptr.vmem [resolvable:$true] %s28
      %31 = dma.hbm_to_vmem [thread:$0]  %s1, 128, %s29, [#allocation7]
    $region9: #{tpu_custom_call.1} parent=1 // pred_fallthru
      _
    // Predicated region
    $region10: #{tpu_custom_call.1} parent=1 // pred_check
      _
    $region11: #{tpu_custom_call.1} parent=1 // pred_check_branch
      %33 = sbr.rel (0) target = $region13
    $region12: #{tpu_custom_call.1} parent=1 // pred_region
      %s35 = ssub.s32 256, 256
      %36 = vsyncadd [#allocation7], %s35
      %s37 = sshll.u32 [#allocation8], 4
      %s38 = int_to_ptr.vmem [resolvable:$true] %s37
      %43 = dma.hbm_to_vmem [thread:$0]  %s2, 256, %s38, [#allocation7], 128, 128, 8
    $region13: #{tpu_custom_call.1} parent=1 // pred_fallthru
      _
    // Predicated region
    $region14: #{tpu_custom_call.1} parent=1 // pred_check
      _
    $region15: #{tpu_custom_call.1} parent=1 // pred_check_branch
      %45 = sbr.rel (0) target = $region17
    $region16: #{tpu_custom_call.1} parent=1 // pred_region
      _
    $region17: #{tpu_custom_call.1} parent=1 // pred_fallthru
      _
    // Predicated region
    $region18: #{tpu_custom_call.1} parent=1 // pred_check
      _
    $region19: #{tpu_custom_call.1} parent=1 // pred_check_branch
      %47 = sbr.rel (0) target = $region21
    $region20: #{tpu_custom_call.1} parent=1 // pred_region
      %48 = dma.done [#allocation4], 128
    $region21: #{tpu_custom_call.1} parent=1 // pred_fallthru
      _
    // Predicated region
    $region22: #{tpu_custom_call.1} parent=1 // pred_check
      _
    $region23: #{tpu_custom_call.1} parent=1 // pred_check_branch
      %50 = sbr.rel (0) target = $region25
    $region24: #{tpu_custom_call.1} parent=1 // pred_region
      %51 = dma.done [#allocation7], 128
    $region25: #{tpu_custom_call.1} parent=1 // pred_fallthru
      _
    // Predicated region
    $region26: #{tpu_custom_call.1} parent=1 // pred_check
      _
    $region27: #{tpu_custom_call.1} parent=1 // pred_check_branch
      %53 = sbr.rel (0) target = $region29
    $region28: #{tpu_custom_call.1} parent=1 // pred_region
      %54 = dma.done [#allocation7], 256
    $region29: #{tpu_custom_call.1} parent=1 // pred_fallthru
      _
    %p55 = scmp.eq.s32.totalorder 0, 0
    // Predicated region
    $region30: #{tpu_custom_call.1} parent=1 // pred_check
      %p56 = pneg %p55
    $region31: #{tpu_custom_call.1} parent=1 // pred_check_branch
      %58 = sbr.rel (%p56) target = $region33
    $region32: #{tpu_custom_call.1} parent=1 // pred_region
      %vm59 = vcmask 130048
      %60 = vst.msk [vmem:[#allocation2] sm:$0xff] %vm59, 0.0
    $region33: #{tpu_custom_call.1} parent=1 // pred_fallthru
      _
    %v61 = vld [vmem:[#allocation3] sm:$0xff]
    %v62 = vld [vmem:[#allocation6] sm:$0xff]
    %v63 = vld [vmem:[#allocation2] sm:$0xff]
    %vm64 = vcmask 64512
    %v66 = vsel %vm64, %v61, 0
    %68 = vmatprep.subr.mxu0 0.0
    %69 = vmatpush1.msra.mxu0 %v62
    %70 = vmatprep.subr.mxu0 0.0
    %71 = vmatpush1.msra.mxu0 0.0
    %72 = vmatprep.subr.mxu0 0.0
    %73 = vmatpush1.msra.mxu0 0.0
    %74 = vmatprep.subr.mxu0 0.0
    %75 = vmatpush1.msra.mxu0 0.0
    %76 = vmatprep.subr.mxu0 0.0
    %77 = vmatpush1.msra.mxu0 0.0
    %78 = vmatprep.subr.mxu0 0.0
    %79 = vmatpush1.msra.mxu0 0.0
    %80 = vmatprep.subr.mxu0 0.0
    %81 = vmatpush1.msra.mxu0 0.0
    %82 = vmatprep.subr.mxu0 0.0
    %83 = vmatpush1.msra.mxu0 0.0
    %84 = vmatprep.subr.mxu0 0.0
    %85 = vmatpush1.msra.mxu0 0.0
    %86 = vmatprep.subr.mxu0 0.0
    %87 = vmatpush1.msra.mxu0 0.0
    %88 = vmatprep.subr.mxu0 0.0
    %89 = vmatpush1.msra.mxu0 0.0
    %90 = vmatprep.subr.mxu0 0.0
    %91 = vmatpush1.msra.mxu0 0.0
    %92 = vmatprep.subr.mxu0 0.0
    %93 = vmatpush1.msra.mxu0 0.0
    %94 = vmatprep.subr.mxu0 0.0
    %95 = vmatpush1.msra.mxu0 0.0
    %96 = vmatprep.subr.mxu0 0.0
    %97 = vmatpush1.msra.mxu0 0.0
    %98 = vmatprep.subr.mxu0 0.0
    %99 = vmatpush1.msra.mxu0 0.0
    %100 = vmatprep.subr.mxu0 0.0
    %101 = vmatpush1.msra.mxu0 0.0
    %102 = vmatprep.subr.mxu0 0.0
    %103 = vmatpush1.msra.mxu0 0.0
    %104 = vmatprep.subr.mxu0 0.0
    %105 = vmatpush1.msra.mxu0 0.0
    %106 = vmatprep.subr.mxu0 0.0
    %107 = vmatpush1.msra.mxu0 0.0
    %108 = vmatprep.subr.mxu0 0.0
    %109 = vmatpush1.msra.mxu0 0.0
    %110 = vmatprep.subr.mxu0 0.0
    %111 = vmatpush1.msra.mxu0 0.0
    %112 = vmatprep.subr.mxu0 0.0
    %113 = vmatpush1.msra.mxu0 0.0
    %114 = vmatprep.subr.mxu0 0.0
    %115 = vmatpush1.msra.mxu0 0.0
    %116 = vmatprep.subr.mxu0 0.0
    %117 = vmatpush1.msra.mxu0 0.0
    %118 = vmatprep.subr.mxu0 0.0
    %119 = vmatpush1.msra.mxu0 0.0
    %120 = vmatprep.subr.mxu0 0.0
    %121 = vmatpush1.msra.mxu0 0.0
    %122 = vmatprep.subr.mxu0 0.0
    %123 = vmatpush1.msra.mxu0 0.0
    %124 = vmatprep.subr.mxu0 0.0
    %125 = vmatpush1.msra.mxu0 0.0
    %126 = vmatprep.subr.mxu0 0.0
    %127 = vmatpush1.msra.mxu0 0.0
    %128 = vmatprep.subr.mxu0 0.0
    %129 = vmatpush1.msra.mxu0 0.0
    %130 = vmatprep.subr.mxu0 0.0
    %131 = vmatpush1.msra.mxu0 0.0
    %132 = vmatprep.mubr.f32.mxu0 0.0
    %133 = vmatmul.mubr.f32.gmra.mrb[0].mxu0 %v66
    %v134 = vpop.f32.mrb[0].mxu0
    %v135 = vadd.f32 0.0, %v134
    %v136 = vpop.f32.mrb[0].mxu0
    %137 = vdwg.mxu0
    %v138 = vadd.f32 %v63, %v135
    %vm139 = vcmask 130048
    %140 = vst.msk [vmem:[#allocation2] sm:$0xff] %vm139, %v138
    // Predicated region
    $region34: #{tpu_custom_call.1} parent=1 // pred_check
      %p141 = pneg %p55
    $region35: #{tpu_custom_call.1} parent=1 // pred_check_branch
      %143 = sbr.rel (%p141) target = $region37
    $region36: #{tpu_custom_call.1} parent=1 // pred_region
      %v144 = vld [vmem:[#allocation2] sm:$0xff]
      %v145 = vld [vmem:[#allocation8] sm:$0xff]
      %v146 = vld [vmem:[#allocation8 + $0x8] sm:$0xff]
      %v147 = vld [vmem:[%s3] sm:$0x1]
      %v149 = vlaneseq
      %v150 = vshrl.u32 %v149, 7
      %v151 = vsub.s32 0, %v150
      %v152 = vrot.slane %v147, %v151
      %v155 = vsel %vm139, %v144, 0
      %157 = vmatprep.subr.mxu0 0.0
      %158 = vmatpush1.msra.mxu0 %v145
      %159 = vmatprep.subr.mxu0 0.0
      %160 = vmatpush1.msra.mxu0 %v146
      %161 = vmatprep.subr.mxu0 0.0
      %162 = vmatpush1.msra.mxu0 0.0
      %163 = vmatprep.subr.mxu0 0.0
      %164 = vmatpush1.msra.mxu0 0.0
      %165 = vmatprep.subr.mxu0 0.0
      %166 = vmatpush1.msra.mxu0 0.0
      %167 = vmatprep.subr.mxu0 0.0
      %168 = vmatpush1.msra.mxu0 0.0
      %169 = vmatprep.subr.mxu0 0.0
      %170 = vmatpush1.msra.mxu0 0.0
      %171 = vmatprep.subr.mxu0 0.0
      %172 = vmatpush1.msra.mxu0 0.0
      %173 = vmatprep.subr.mxu0 0.0
      %174 = vmatpush1.msra.mxu0 0.0
      %175 = vmatprep.subr.mxu0 0.0
      %176 = vmatpush1.msra.mxu0 0.0
      %177 = vmatprep.subr.mxu0 0.0
      %178 = vmatpush1.msra.mxu0 0.0
      %179 = vmatprep.subr.mxu0 0.0
      %180 = vmatpush1.msra.mxu0 0.0
      %181 = vmatprep.subr.mxu0 0.0
      %182 = vmatpush1.msra.mxu0 0.0
      %183 = vmatprep.subr.mxu0 0.0
      %184 = vmatpush1.msra.mxu0 0.0
      %185 = vmatprep.subr.mxu0 0.0
      %186 = vmatpush1.msra.mxu0 0.0
      %187 = vmatprep.subr.mxu0 0.0
      %188 = vmatpush1.msra.mxu0 0.0
      %189 = vmatprep.subr.mxu0 0.0
      %190 = vmatpush1.msra.mxu0 0.0
      %191 = vmatprep.subr.mxu0 0.0
      %192 = vmatpush1.msra.mxu0 0.0
      %193 = vmatprep.subr.mxu0 0.0
      %194 = vmatpush1.msra.mxu0 0.0
      %195 = vmatprep.subr.mxu0 0.0
      %196 = vmatpush1.msra.mxu0 0.0
      %197 = vmatprep.subr.mxu0 0.0
      %198 = vmatpush1.msra.mxu0 0.0
      %199 = vmatprep.subr.mxu0 0.0
      %200 = vmatpush1.msra.mxu0 0.0
      %201 = vmatprep.subr.mxu0 0.0
      %202 = vmatpush1.msra.mxu0 0.0
      %203 = vmatprep.subr.mxu0 0.0
      %204 = vmatpush1.msra.mxu0 0.0
      %205 = vmatprep.subr.mxu0 0.0
      %206 = vmatpush1.msra.mxu0 0.0
      %207 = vmatprep.subr.mxu0 0.0
      %208 = vmatpush1.msra.mxu0 0.0
      %209 = vmatprep.subr.mxu0 0.0
      %210 = vmatpush1.msra.mxu0 0.0
      %211 = vmatprep.subr.mxu0 0.0
      %212 = vmatpush1.msra.mxu0 0.0
      %213 = vmatprep.subr.mxu0 0.0
      %214 = vmatpush1.msra.mxu0 0.0
      %215 = vmatprep.subr.mxu0 0.0
      %216 = vmatpush1.msra.mxu0 0.0
      %217 = vmatprep.subr.mxu0 0.0
      %218 = vmatpush1.msra.mxu0 0.0
      %219 = vmatprep.subr.mxu0 0.0
      %220 = vmatpush1.msra.mxu0 0.0
      %221 = vmatprep.mubr.f32.mxu0 0.0
      %222 = vmatmul.mubr.f32.gmra.mrb[0].mxu0 %v155
      %v223 = vpop.f32.mrb[0].mxu0
      %v224 = vadd.f32 %v152, %v223
      %v225 = vpop.f32.mrb[0].mxu0
      %226 = vdwg.mxu0
      %v227 = vmul.f32 %v224, 0.01
      %v228 = vmax.f32 %v224, %v227
      %vm229 = vcmask 261120
      %230 = vst.msk [vmem:[#allocation9] sm:$0xff] %vm229, %v228
    $region37: #{tpu_custom_call.1} parent=1 // pred_fallthru
      _
    // Predicated region
    $region38: #{tpu_custom_call.1} parent=1 // pred_check
      _
    $region39: #{tpu_custom_call.1} parent=1 // pred_check_branch
      %232 = sbr.rel (0) target = $region41
    $region40: #{tpu_custom_call.1} parent=1 // pred_region
      %s234 = ssub.s32 128, 128
      %235 = vsyncadd [#allocation5], %s234
      %s237 = sshll.u32 [#allocation9], 4
      %s238 = int_to_ptr.vmem [resolvable:$true] %s237
      %240 = dma.vmem_to_hbm [thread:$0]  %s238, 128, %s4, [#allocation5]
    $region41: #{tpu_custom_call.1} parent=1 // pred_fallthru
      _
    // Predicated region
    $region42: #{tpu_custom_call.1} parent=1 // pred_check
      _
    $region43: #{tpu_custom_call.1} parent=1 // pred_check_branch
      %242 = sbr.rel (0) target = $region45
    $region44: #{tpu_custom_call.1} parent=1 // pred_region
      %243 = dma.done [#allocation5], 128
    $region45: #{tpu_custom_call.1} parent=1 // pred_fallthru
      _
    %244 = vsyncpa [#allocation4], 1
    %245 = vsyncpa [#allocation7], 1
    %246 = vsyncpa [#allocation5], 1

</llo_original>
